<compile_context>
chip_gen: v6e
topology: v6e:2x2x1
jax: 0.10.0
libtpu: 0.0.40
codegen_flags: <defaults>
</compile_context>

<pallas_src>
import functools

import jax
import jax.numpy as jnp
from jax.experimental import pallas as pl
from jax.experimental.pallas import tpu as pltpu


# ------------------------------- helpers ----------------------------------- #

def _pick_block(dim, target, align):
    """Largest block <= target that divides `dim` and is a multiple of `align`;
    falls back to the full dim (always legal for a BlockSpec)."""
    if dim <= target:
        return dim
    b = (target // align) * align
    while b >= align:
        if dim % b == 0:
            return b
        b -= align
    return dim


# ------------------------ fused QKV projection kernel ----------------------- #

def _qkv_proj_kernel(x_ref, wq_ref, wk_ref, wv_ref, q_ref, k_ref, v_ref,
                     accq_ref, acck_ref, accv_ref):
    kk = pl.program_id(2)

    @pl.when(kk == 0)
    def _():
        accq_ref[...] = jnp.zeros(accq_ref.shape, accq_ref.dtype)
        acck_ref[...] = jnp.zeros(acck_ref.shape, acck_ref.dtype)
        accv_ref[...] = jnp.zeros(accv_ref.shape, accv_ref.dtype)

    x = x_ref[...]                                        # loaded once, used 3x
    accq_ref[...] += jnp.dot(x, wq_ref[...], preferred_element_type=jnp.float32)
    acck_ref[...] += jnp.dot(x, wk_ref[...], preferred_element_type=jnp.float32)
    accv_ref[...] += jnp.dot(x, wv_ref[...], preferred_element_type=jnp.float32)

    @pl.when(kk == pl.num_programs(2) - 1)
    def _():
        q_ref[...] = accq_ref[...].astype(q_ref.dtype)
        k_ref[...] = acck_ref[...].astype(k_ref.dtype)
        v_ref[...] = accv_ref[...].astype(v_ref.dtype)


def qkv_projection(x2d, wq, wk, wv, *, row_block=512, n_block=512, k_block=512):
    """x2d: (N, qdim); wq/wk/wv: (qdim, inner)  ->  q2d, k2d, v2d each (N, inner).

    One pass over x for all three projections; lane-dense (tm, tn) output stores."""
    N, qdim = x2d.shape
    inner = wq.shape[1]
    tm = _pick_block(N, row_block, 8)
    tn = _pick_block(inner, n_block, 128)
    tk = _pick_block(qdim, k_block, 128)
    grid = (N // tm, inner // tn, qdim // tk)

    itemsize = jnp.dtype(x2d.dtype).itemsize
    flops = 2 * N * qdim * 3 * inner
    bytes_acc = itemsize * (N * qdim * (inner // tn)          # x, re-read per n block
                            + 3 * qdim * inner * (N // tm)    # weights per row block
                            + 3 * N * inner)                  # outputs once

    w_spec = pl.BlockSpec((tk, tn), lambda i, j, kk: (kk, j))
    o_spec = pl.BlockSpec((tm, tn), lambda i, j, kk: (i, j))
    out_sd = jax.ShapeDtypeStruct((N, inner), x2d.dtype)

    return pl.pallas_call(
        _qkv_proj_kernel,
        out_shape=(out_sd, out_sd, out_sd),
        grid=grid,
        in_specs=[
            pl.BlockSpec((tm, tk), lambda i, j, kk: (i, kk)),
            w_spec, w_spec, w_spec,
        ],
        out_specs=(o_spec, o_spec, o_spec),
        scratch_shapes=[pltpu.VMEM((tm, tn), jnp.float32)] * 3,
        compiler_params=pltpu.CompilerParams(
            dimension_semantics=("parallel", "parallel", "arbitrary")),
        cost_estimate=pl.CostEstimate(flops=int(flops), transcendentals=0,
                                      bytes_accessed=int(bytes_acc)),
    )(x2d, wq, wk, wv)


# --------------------- flash attention (online softmax) --------------------- #

def _flash_attn_kernel(q_ref, k_ref, v_ref, o_ref, m_ref, l_ref, acc_ref,
                       *, heads, dim_head):
    ki = pl.program_id(1)

    @pl.when(ki == 0)
    def _():
        m_ref[...] = jnp.full(m_ref.shape, -jnp.inf, m_ref.dtype)
        l_ref[...] = jnp.zeros(l_ref.shape, l_ref.dtype)
        acc_ref[...] = jnp.zeros(acc_ref.shape, acc_ref.dtype)

    q = q_ref[...]                 # (tq, heads*Dh)  (scale pre-folded into Wq)
    k = k_ref[...]                 # (tk, heads*Dh)
    v = v_ref[...]                 # (tk, heads*Dh)

    # Static unroll over heads; all slices are compile-time constants.
    for h in range(heads):
        sl = slice(h * dim_head, (h + 1) * dim_head)
        # scores = (q*scale) @ k^T  (matches torch.baddbmm(..., beta=0, alpha=scale)).
        s = jax.lax.dot_general(q[:, sl], k[:, sl], (((1,), (1,)), ((), ())),
                                preferred_element_type=jnp.float32)      # (tq, tk)
        m_prev = m_ref[:, h:h + 1]
        m_new = jnp.maximum(m_prev, jnp.max(s, axis=-1, keepdims=True))
        alpha = jnp.exp(m_prev - m_new)
        p = jnp.exp(s - m_new)
        l_ref[:, h:h + 1] = alpha * l_ref[:, h:h + 1] + jnp.sum(p, axis=-1,
                                                                keepdims=True)
        acc_ref[:, sl] = alpha * acc_ref[:, sl] + jnp.dot(
            p.astype(v.dtype), v[:, sl], preferred_element_type=jnp.float32)
        m_ref[:, h:h + 1] = m_new

    @pl.when(ki == pl.num_programs(1) - 1)
    def _():
        inv = pl.reciprocal(l_ref[...], approx=True)   # (tq, heads), EUP slot
        for h in range(heads):
            sl = slice(h * dim_head, (h + 1) * dim_head)
            o_ref[:, sl] = (acc_ref[:, sl] * inv[:, h:h + 1]).astype(o_ref.dtype)


def flash_attention(q2d, k2d, v2d, *, b, S, heads, dim_head,
                    q_block=512, kv_block=256):
    """q2d/k2d/v2d: (b*S, heads*dim_head) -> (b*S, heads*dim_head).

    Head loop lives inside the kernel; no S x S score matrix is materialized and no
    per-head re-streaming of Q/K/V happens (all heads consume one lane-dense block)."""
    N, inner = q2d.shape
    assert inner == heads * dim_head
    tq = _pick_block(S, q_block, 8)
    tk = _pick_block(S, kv_block, 8)
    q_blocks = S // tq
    kv_blocks = S // tk
    grid = (b * q_blocks, kv_blocks)   # leading axis >= 2 for v7x 2-TC sharding

    itemsize = jnp.dtype(q2d.dtype).itemsize
    flops = 4 * N * S * inner
    transc = heads * N * S
    # Q + O once, K/V re-read once per q block.
    bytes_acc = itemsize * N * inner * (2 + 2 * q_blocks)

    kv_index = lambda i, ki: ((i // q_blocks) * kv_blocks + ki, 0)
    kernel = functools.partial(_flash_attn_kernel, heads=heads, dim_head=dim_head)

    return pl.pallas_call(
        kernel,
        out_shape=jax.ShapeDtypeStruct((N, inner), q2d.dtype),
        grid=grid,
        in_specs=[
            pl.BlockSpec((tq, inner), lambda i, ki: (i, 0)),
            pl.BlockSpec((tk, inner), kv_index),
            pl.BlockSpec((tk, inner), kv_index),
        ],
        out_specs=pl.BlockSpec((tq, inner), lambda i, ki: (i, 0)),
        scratch_shapes=[
            pltpu.VMEM((tq, heads), jnp.float32),   # running max (per head)
            pltpu.VMEM((tq, heads), jnp.float32),   # running sum (per head)
            pltpu.VMEM((tq, inner), jnp.float32),   # output accumulator
        ],
        compiler_params=pltpu.CompilerParams(
            dimension_semantics=("parallel", "arbitrary")),
        cost_estimate=pl.CostEstimate(flops=int(flops), transcendentals=int(transc),
                                      bytes_accessed=int(bytes_acc)),
    )(q2d, k2d, v2d)


# ----------------------------- output projection ---------------------------- #

def _out_proj_kernel(a_ref, w_ref, b_ref, o_ref, acc_ref):
    kk = pl.program_id(2)

    @pl.when(kk == 0)
    def _():
        acc_ref[...] = jnp.zeros(acc_ref.shape, acc_ref.dtype)

    acc_ref[...] += jnp.dot(a_ref[...], w_ref[...],
                            preferred_element_type=jnp.float32)

    @pl.when(kk == pl.num_programs(2) - 1)
    def _():
        o_ref[...] = (acc_ref[...] + b_ref[...]).astype(o_ref.dtype)


def out_projection(a2d, wo, bias, *, row_block=512, n_block=512, k_block=512):
    """a2d: (N, inner), wo: (inner, qdim), bias: (1, qdim) f32 -> (N, qdim).
    Standard full-K GEMM; the head merge is just the contraction over `inner`."""
    N, inner = a2d.shape
    qdim = wo.shape[1]
    tm = _pick_block(N, row_block, 8)
    tn = _pick_block(qdim, n_block, 128)
    tk = _pick_block(inner, k_block, 128)
    grid = (N // tm, qdim // tn, inner // tk)

    itemsize = jnp.dtype(a2d.dtype).itemsize
    flops = 2 * N * inner * qdim
    bytes_acc = itemsize * (N * inner * (qdim // tn)
                            + inner * qdim * (N // tm)
                            + N * qdim)

    return pl.pallas_call(
        _out_proj_kernel,
        out_shape=jax.ShapeDtypeStruct((N, qdim), a2d.dtype),
        grid=grid,
        in_specs=[
            pl.BlockSpec((tm, tk), lambda i, j, kk: (i, kk)),
            pl.BlockSpec((tk, tn), lambda i, j, kk: (kk, j)),
            pl.BlockSpec((1, tn), lambda i, j, kk: (0, j)),
        ],
        out_specs=pl.BlockSpec((tm, tn), lambda i, j, kk: (i, j)),
        scratch_shapes=[pltpu.VMEM((tm, tn), jnp.float32)],
        compiler_params=pltpu.CompilerParams(
            dimension_semantics=("parallel", "parallel", "arbitrary")),
        cost_estimate=pl.CostEstimate(flops=int(flops), transcendentals=0,
                                      bytes_accessed=int(bytes_acc)),
    )(a2d, wo, bias)


# ------------------------------ module wrapper ------------------------------ #

def init_params(key, query_dim, heads, dim_head):
    inner_dim = heads * dim_head
    k1, k2, k3, k4, k5 = jax.random.split(key, 5)
    scale_qkv = 1.0 / jnp.sqrt(query_dim)
    scale_o = 1.0 / jnp.sqrt(inner_dim)
    return {
        # stored already transposed: (in, out)
        "wq_t": jax.random.uniform(k1, (query_dim, inner_dim), jnp.float32,
                                   -scale_qkv, scale_qkv),
        "wk_t": jax.random.uniform(k2, (query_dim, inner_dim), jnp.float32,
                                   -scale_qkv, scale_qkv),
        "wv_t": jax.random.uniform(k3, (query_dim, inner_dim), jnp.float32,
                                   -scale_qkv, scale_qkv),
        "wo_t": jax.random.uniform(k4, (inner_dim, query_dim), jnp.float32,
                                   -scale_o, scale_o),
        "bo": jax.random.uniform(k5, (query_dim,), jnp.float32,
                                 -scale_o, scale_o),
    }


def prepare_params(params, *, dim_head, compute_dtype=jnp.float32):
    """One-time weight prep (hoisted out of the forward path):
    the attention scale is folded into the Q weights; pass compute_dtype=jnp.bfloat16
    to run the whole activation/GEMM path in bf16 (softmax state stays f32)."""
    scale = dim_head ** -0.5
    return {
        "wq": (params["wq_t"] * scale).astype(compute_dtype),
        "wk": params["wk_t"].astype(compute_dtype),
        "wv": params["wv_t"].astype(compute_dtype),
        "wo": params["wo_t"].astype(compute_dtype),
        "bo": params["bo"].reshape(1, -1).astype(jnp.float32),
    }


def fully_frame_attention_forward(hidden_states, packed, *, heads, dim_head,
                                  clip_length, row_block=512, q_block=512,
                                  kv_block=256):
    """hidden_states: (batch*frames, seq_len, query_dim) -> same shape."""
    bf, seq, qdim = hidden_states.shape
    assert bf % clip_length == 0
    b = bf // clip_length
    S = clip_length * seq                      # '(b f) d c -> b (f d) c'
    N = b * S
    compute_dtype = packed["wq"].dtype

    # '(b f) d c -> b (f d) c' is a contiguous reshape; flatten rows for the GEMMs.
    x2d = hidden_states.reshape(N, qdim).astype(compute_dtype)

    # Fused Q/K/V projection (x read once; scale already folded into Wq).
    q2d, k2d, v2d = qkv_projection(x2d, packed["wq"], packed["wk"], packed["wv"],
                                   row_block=row_block)

    # Flash attention over the full (frames*seq) token axis; all heads per block.
    attn2d = flash_attention(q2d, k2d, v2d, b=b, S=S, heads=heads,
                             dim_head=dim_head, q_block=q_block, kv_block=kv_block)

    # to_out[0] linear (+bias) as a full-K GEMM; to_out[1] dropout is identity.
    out2d = out_projection(attn2d, packed["wo"], packed["bo"], row_block=row_block)

    # 'b (f d) c -> (b f) d c'
    return out2d.reshape(bf, seq, qdim).astype(hidden_states.dtype)


# ------------------------------ reference (JAX) ----------------------------- #

def reference_forward(hidden_states, params, *, heads, dim_head, clip_length):
    bf, seq, qdim = hidden_states.shape
    b = bf // clip_length
    inner = heads * dim_head
    scale = dim_head ** -0.5
    x = hidden_states.reshape(bf * seq, qdim)
    q = x @ params["wq_t"]
    k = x @ params["wk_t"]
    v = x @ params["wv_t"]
    S = clip_length * seq
    q = q.reshape(b, S, heads, dim_head).transpose(0, 2, 1, 3)
    k = k.reshape(b, S, heads, dim_head).transpose(0, 2, 1, 3)
    v = v.reshape(b, S, heads, dim_head).transpose(0, 2, 1, 3)
    s = jnp.einsum("bhqd,bhkd->bhqk", q, k) * scale
    p = jax.nn.softmax(s, axis=-1)
    o = jnp.einsum("bhqk,bhkd->bhqd", p, v)
    o = o.transpose(0, 2, 1, 3).reshape(b, S, inner)
    o = o.reshape(b * S, inner) @ params["wo_t"] + params["bo"]
    return o.reshape(bf, seq, qdim)


# ---------------------------------- main ------------------------------------ #

if __name__ == "__main__":
    # Small config consistent with the module.
    query_dim = 32
    heads = 4
    dim_head = 8            # inner_dim = 32
    clip_length = 2         # frames per video
    batch_videos = 2
    seq_len = 16            # tokens per frame -> S = clip_length*seq_len = 32

    key = jax.random.PRNGKey(0)
    k_params, k_x = jax.random.split(key)
    params = init_params(k_params, query_dim, heads, dim_head)
    packed = prepare_params(params, dim_head=dim_head, compute_dtype=jnp.float32)

    hidden_states = jax.random.normal(
        k_x, (batch_videos * clip_length, seq_len, query_dim), jnp.float32)

    # Small blocks so multi-tile / online-softmax paths are actually exercised
    # (4 row tiles in the GEMMs, 2 q tiles and 4 kv tiles per batch element).
    out = fully_frame_attention_forward(
        hidden_states, packed, heads=heads, dim_head=dim_head,
        clip_length=clip_length, row_block=16, q_block=16, kv_block=8)
    out = jax.block_until_ready(out)

    ref = reference_forward(
        hidden_states, params, heads=heads, dim_head=dim_head,
        clip_length=clip_length)

    assert out.shape == hidden_states.shape
    assert jnp.allclose(out, ref, atol=1e-3, rtol=1e-3), \
        f"max abs err {jnp.max(jnp.abs(out - ref))}"
    print("KERNEL_OK")
</pallas_src>

<mosaic_0001>
module attributes {stable_mosaic.version = 11 : i64} {
  func.func @_qkv_proj_kernel(%arg0: i32, %arg1: i32, %arg2: i32, %arg3: memref<16x32xf32, #tpu.memory_space<vmem>>, %arg4: memref<32x32xf32, #tpu.memory_space<vmem>>, %arg5: memref<32x32xf32, #tpu.memory_space<vmem>>, %arg6: memref<32x32xf32, #tpu.memory_space<vmem>>, %arg7: memref<16x32xf32, #tpu.memory_space<vmem>>, %arg8: memref<16x32xf32, #tpu.memory_space<vmem>>, %arg9: memref<16x32xf32, #tpu.memory_space<vmem>>, %arg10: memref<16x32xf32, #tpu.memory_space<vmem>>, %arg11: memref<16x32xf32, #tpu.memory_space<vmem>>, %arg12: memref<16x32xf32, #tpu.memory_space<vmem>>) attributes {dimension_semantics = [#tpu.dimension_semantics<parallel>, #tpu.dimension_semantics<parallel>, #tpu.dimension_semantics<arbitrary>], iteration_bounds = array<i64: 4, 1, 1>, scalar_prefetch = 0 : i64, scratch_operands = 3 : i64, tpu.core_type = #tpu.core_type<tc>, window_params = [{transform_indices = @transform_0, window_bounds = array<i64: 16, 32>}, {transform_indices = @transform_1, window_bounds = array<i64: 32, 32>}, {transform_indices = @transform_2, window_bounds = array<i64: 32, 32>}, {transform_indices = @transform_3, window_bounds = array<i64: 32, 32>}, {transform_indices = @transform_4, window_bounds = array<i64: 16, 32>}, {transform_indices = @transform_5, window_bounds = array<i64: 16, 32>}, {transform_indices = @transform_6, window_bounds = array<i64: 16, 32>}]} {
    %c0_i32 = arith.constant 0 : i32
    %0 = arith.cmpi eq, %arg2, %c0_i32 : i32
    %1 = arith.extui %0 : i1 to i32
    %c0_i32_0 = arith.constant 0 : i32
    %2 = arith.cmpi ne, %1, %c0_i32_0 : i32
    scf.if %2 {
      %cst_24 = arith.constant 0.000000e+00 : f32
      %22 = vector.broadcast %cst_24 : f32 to vector<16x32xf32>
      %c0_25 = arith.constant 0 : index
      %c0_26 = arith.constant 0 : index
      %23 = vector.load %arg10[%c0_25, %c0_26] : memref<16x32xf32, #tpu.memory_space<vmem>>, vector<16x32xf32>
      tpu.vector_store %arg10[%c0_25, %c0_26], %22 {strides = array<i32>} : memref<16x32xf32, #tpu.memory_space<vmem>>, vector<16x32xf32>,
      %cst_27 = arith.constant 0.000000e+00 : f32
      %24 = vector.broadcast %cst_27 : f32 to vector<16x32xf32>
      %c0_28 = arith.constant 0 : index
      %c0_29 = arith.constant 0 : index
      %25 = vector.load %arg11[%c0_28, %c0_29] : memref<16x32xf32, #tpu.memory_space<vmem>>, vector<16x32xf32>
      tpu.vector_store %arg11[%c0_28, %c0_29], %24 {strides = array<i32>} : memref<16x32xf32, #tpu.memory_space<vmem>>, vector<16x32xf32>,
      %cst_30 = arith.constant 0.000000e+00 : f32
      %26 = vector.broadcast %cst_30 : f32 to vector<16x32xf32>
      %c0_31 = arith.constant 0 : index
      %c0_32 = arith.constant 0 : index
      %27 = vector.load %arg12[%c0_31, %c0_32] : memref<16x32xf32, #tpu.memory_space<vmem>>, vector<16x32xf32>
      tpu.vector_store %arg12[%c0_31, %c0_32], %26 {strides = array<i32>} : memref<16x32xf32, #tpu.memory_space<vmem>>, vector<16x32xf32>,
    } else {
    }
    %c0 = arith.constant 0 : index
    %c0_1 = arith.constant 0 : index
    %3 = vector.load %arg3[%c0, %c0_1] : memref<16x32xf32, #tpu.memory_space<vmem>>, vector<16x32xf32>
    %c0_2 = arith.constant 0 : index
    %c0_3 = arith.constant 0 : index
    %4 = vector.load %arg10[%c0_2, %c0_3] : memref<16x32xf32, #tpu.memory_space<vmem>>, vector<16x32xf32>
    %c0_4 = arith.constant 0 : index
    %c0_5 = arith.constant 0 : index
    %5 = vector.load %arg4[%c0_4, %c0_5] : memref<32x32xf32, #tpu.memory_space<vmem>>, vector<32x32xf32>
    %cst = arith.constant dense<0.000000e+00> : vector<16x32xf32>
    %6 = tpu.matmul %3, %5, %cst {dimension_numbers = #tpu.dot_dimension_numbers<[1], [0], [0], [1], [0, 0, 1, 1], [], []>} : vector<16x32xf32>, vector<32x32xf32>, vector<16x32xf32> -> vector<16x32xf32>
    %7 = arith.addf %4, %6 : vector<16x32xf32>
    %c0_6 = arith.constant 0 : index
    %c0_7 = arith.constant 0 : index
    %8 = vector.load %arg10[%c0_6, %c0_7] : memref<16x32xf32, #tpu.memory_space<vmem>>, vector<16x32xf32>
    tpu.vector_store %arg10[%c0_6, %c0_7], %7 {strides = array<i32>} : memref<16x32xf32, #tpu.memory_space<vmem>>, vector<16x32xf32>,
    %c0_8 = arith.constant 0 : index
    %c0_9 = arith.constant 0 : index
    %9 = vector.load %arg11[%c0_8, %c0_9] : memref<16x32xf32, #tpu.memory_space<vmem>>, vector<16x32xf32>
    %c0_10 = arith.constant 0 : index
    %c0_11 = arith.constant 0 : index
    %10 = vector.load %arg5[%c0_10, %c0_11] : memref<32x32xf32, #tpu.memory_space<vmem>>, vector<32x32xf32>
    %cst_12 = arith.constant dense<0.000000e+00> : vector<16x32xf32>
    %11 = tpu.matmul %3, %10, %cst_12 {dimension_numbers = #tpu.dot_dimension_numbers<[1], [0], [0], [1], [0, 0, 1, 1], [], []>} : vector<16x32xf32>, vector<32x32xf32>, vector<16x32xf32> -> vector<16x32xf32>
    %12 = arith.addf %9, %11 : vector<16x32xf32>
    %c0_13 = arith.constant 0 : index
    %c0_14 = arith.constant 0 : index
    %13 = vector.load %arg11[%c0_13, %c0_14] : memref<16x32xf32, #tpu.memory_space<vmem>>, vector<16x32xf32>
    tpu.vector_store %arg11[%c0_13, %c0_14], %12 {strides = array<i32>} : memref<16x32xf32, #tpu.memory_space<vmem>>, vector<16x32xf32>,
    %c0_15 = arith.constant 0 : index
    %c0_16 = arith.constant 0 : index
    %14 = vector.load %arg12[%c0_15, %c0_16] : memref<16x32xf32, #tpu.memory_space<vmem>>, vector<16x32xf32>
    %c0_17 = arith.constant 0 : index
    %c0_18 = arith.constant 0 : index
    %15 = vector.load %arg6[%c0_17, %c0_18] : memref<32x32xf32, #tpu.memory_space<vmem>>, vector<32x32xf32>
    %cst_19 = arith.constant dense<0.000000e+00> : vector<16x32xf32>
    %16 = tpu.matmul %3, %15, %cst_19 {dimension_numbers = #tpu.dot_dimension_numbers<[1], [0], [0], [1], [0, 0, 1, 1], [], []>} : vector<16x32xf32>, vector<32x32xf32>, vector<16x32xf32> -> vector<16x32xf32>
    %17 = arith.addf %14, %16 : vector<16x32xf32>
    %c0_20 = arith.constant 0 : index
    %c0_21 = arith.constant 0 : index
    %18 = vector.load %arg12[%c0_20, %c0_21] : memref<16x32xf32, #tpu.memory_space<vmem>>, vector<16x32xf32>
    tpu.vector_store %arg12[%c0_20, %c0_21], %17 {strides = array<i32>} : memref<16x32xf32, #tpu.memory_space<vmem>>, vector<16x32xf32>,
    %c0_i32_22 = arith.constant 0 : i32
    %19 = arith.cmpi eq, %arg2, %c0_i32_22 : i32
    %20 = arith.extui %19 : i1 to i32
    %c0_i32_23 = arith.constant 0 : i32
    %21 = arith.cmpi ne, %20, %c0_i32_23 : i32
    scf.if %21 {
      %c0_24 = arith.constant 0 : index
      %c0_25 = arith.constant 0 : index
      %22 = vector.load %arg10[%c0_24, %c0_25] : memref<16x32xf32, #tpu.memory_space<vmem>>, vector<16x32xf32>
      %c0_26 = arith.constant 0 : index
      %c0_27 = arith.constant 0 : index
      %23 = vector.load %arg7[%c0_26, %c0_27] : memref<16x32xf32, #tpu.memory_space<vmem>>, vector<16x32xf32>
      tpu.vector_store %arg7[%c0_26, %c0_27], %22 {strides = array<i32>} : memref<16x32xf32, #tpu.memory_space<vmem>>, vector<16x32xf32>,
      %c0_28 = arith.constant 0 : index
      %c0_29 = arith.constant 0 : index
      %24 = vector.load %arg11[%c0_28, %c0_29] : memref<16x32xf32, #tpu.memory_space<vmem>>, vector<16x32xf32>
      %c0_30 = arith.constant 0 : index
      %c0_31 = arith.constant 0 : index
      %25 = vector.load %arg8[%c0_30, %c0_31] : memref<16x32xf32, #tpu.memory_space<vmem>>, vector<16x32xf32>
      tpu.vector_store %arg8[%c0_30, %c0_31], %24 {strides = array<i32>} : memref<16x32xf32, #tpu.memory_space<vmem>>, vector<16x32xf32>,
      %c0_32 = arith.constant 0 : index
      %c0_33 = arith.constant 0 : index
      %26 = vector.load %arg12[%c0_32, %c0_33] : memref<16x32xf32, #tpu.memory_space<vmem>>, vector<16x32xf32>
      %c0_34 = arith.constant 0 : index
      %c0_35 = arith.constant 0 : index
      %27 = vector.load %arg9[%c0_34, %c0_35] : memref<16x32xf32, #tpu.memory_space<vmem>>, vector<16x32xf32>
      tpu.vector_store %arg9[%c0_34, %c0_35], %26 {strides = array<i32>} : memref<16x32xf32, #tpu.memory_space<vmem>>, vector<16x32xf32>,
    } else {
    }
    return
  }
  func.func @transform_0(%arg0: i32, %arg1: i32, %arg2: i32) -> (i32, i32) {
    %c0_i32 = arith.constant 0 : i32
    return %arg0, %arg2 : i32, i32
  }
  func.func @transform_1(%arg0: i32, %arg1: i32, %arg2: i32) -> (i32, i32) {
    %c0_i32 = arith.constant 0 : i32
    return %arg2, %arg1 : i32, i32
  }
  func.func @transform_2(%arg0: i32, %arg1: i32, %arg2: i32) -> (i32, i32) {
    %c0_i32 = arith.constant 0 : i32
    return %arg2, %arg1 : i32, i32
  }
  func.func @transform_3(%arg0: i32, %arg1: i32, %arg2: i32) -> (i32, i32) {
    %c0_i32 = arith.constant 0 : i32
    return %arg2, %arg1 : i32, i32
  }
  func.func @transform_4(%arg0: i32, %arg1: i32, %arg2: i32) -> (i32, i32) {
    %c0_i32 = arith.constant 0 : i32
    return %arg0, %arg1 : i32, i32
  }
  func.func @transform_5(%arg0: i32, %arg1: i32, %arg2: i32) -> (i32, i32) {
    %c0_i32 = arith.constant 0 : i32
    return %arg0, %arg1 : i32, i32
  }
  func.func @transform_6(%arg0: i32, %arg1: i32, %arg2: i32) -> (i32, i32) {
    %c0_i32 = arith.constant 0 : i32
    return %arg0, %arg1 : i32, i32
  }
}

</mosaic_0001>

<llo_original>
// kernel: tpu_custom_call.1
$region0: #{tpu_custom_call.1}
  #allocation0 [shape = 'u32[]', space=smem, size = 0x4, offset = 0x4, fixed_abs, tag = 'smem constant byte address 0x4 - core index']
  #allocation1 [shape = 'u32[144,128]{1,0:T(1,128)}', space=vmem, size = 0x12000, scoped, tag = 'internal scratch']
  #allocation2 [shape = 'f32[16,32]{1,0:T(8,128)}', space=vmem, size = 0x2000, scoped, tag = 'scratch operand']
  #allocation3 [shape = 'f32[16,32]{1,0:T(8,128)}', space=vmem, size = 0x2000, scoped, tag = 'scratch operand']
  #allocation4 [shape = 'f32[16,32]{1,0:T(8,128)}', space=vmem, size = 0x2000, scoped, tag = 'scratch operand']
  %s0 = inlined_call_operand.vmem [shape: f32[64,32], index: 0, kind: input, shape index: {}]
  %s1 = inlined_call_operand.vmem [shape: f32[32,32], index: 1, kind: input, shape index: {}]
  %s2 = inlined_call_operand.vmem [shape: f32[32,32], index: 2, kind: input, shape index: {}]
  %s3 = inlined_call_operand.vmem [shape: f32[32,32], index: 3, kind: input, shape index: {}]
  %s4 = inlined_call_operand.vmem [shape: f32[64,32], index: 4, kind: output, shape index: {0}]
  %s5 = inlined_call_operand.vmem [shape: f32[64,32], index: 5, kind: output, shape index: {1}]
  %s6 = inlined_call_operand.vmem [shape: f32[64,32], index: 6, kind: output, shape index: {2}]
  %7 = xla_tuple %s4, %s5, %s6
  %s8 = sld [smem:[#allocation0]]
  $region73: #{tpu_custom_call.1} parent=0
    _
  %s10 = ssub.s32 1, %s8
  %s11 = scalar_select 0, %s10, %s8
  loop: start=0, step=1, limit=6
  $region2: #{tpu_custom_call.1} parent=0 // loop_pre_header
    _
  $region3: #{tpu_custom_call.1} parent=0 // loop_header
    %s13 = sphi 0, %s17
    %p14 = scmp.ge.s32.totalorder %s13, 6
    %s20 = sphi 0, %s39
    %s21 = sphi 0, %s35
    %s22 = sphi 0, %s31
    %s23 = sphi 0, %s20
    %s24 = sphi 0, %s21
    %s25 = sphi 0, %s22
    %s26 = sphi 0, %s23
    %s27 = sphi 0, %s24
    %s28 = sphi 0, %s25
    %s44 = sphi 0, %s46
    %s47 = sphi 0, %s44
    %s48 = sphi 0, %s47
    %s64 = sphi 0, %s48
    %s72 = sphi 0, %s74
    %s75 = sphi 0, %s72
    %s76 = sphi 0, %s75
    %s92 = sphi 0, %s76
    %s100 = sphi 0, %s102
    %s103 = sphi 0, %s100
    %s104 = sphi 0, %s103
    %s120 = sphi 0, %s104
    %s128 = sphi 0, %s130
    %s131 = sphi 0, %s128
    %s132 = sphi 0, %s131
    %s148 = sphi 0, %s132
    %s156 = sphi 0, %s158
    %s159 = sphi 0, %s156
    %s160 = sphi 0, %s159
    %s176 = sphi 0, %s160
    %s184 = sphi 0, %s186
    %s187 = sphi 0, %s184
    %s188 = sphi 0, %s187
    %s204 = sphi 0, %s188
    %s212 = sphi 0, %s214
    %s215 = sphi 0, %s212
    %s216 = sphi 0, %s215
    %s232 = sphi 0, %s216
  $region4: #{tpu_custom_call.1} parent=0 // loop_header_branch
    %16 = sbr.rel (%p14) target = $region8
  $region5: #{tpu_custom_call.1} parent=0 // loop_body
    %s18 = ssub.s32 %s13, 1
    %s19 = ssub.s32 %s13, 2
    %s29 = sadd.s32 1, %s22
    %p30 = scmp.ge.s32.totalorder %s29, 1
    %s31 = scalar_select %p30, 0, %s29
    %s32 = sadd.s32 1, %s21
    %s33 = scalar_select %p30, %s32, %s21
    %p34 = scmp.ge.s32.totalorder %s33, 1
    %s35 = scalar_select %p34, 0, %s33
    %s36 = sadd.s32 1, %s20
    %s37 = scalar_select %p34, %s36, %s20
    %p38 = scmp.ge.s32.totalorder %s37, 4
    %s39 = scalar_select %p38, 0, %s37
    %s40 = ssub.s32 %s20, %s39
    %s41 = ssub.s32 %s22, %s31
    %s42 = sor.u32 %s40, %s41
    %p43 = scmp.eq.s32.totalorder %s42, 0
    %s45 = sadd.s32 %s44, 1
    %s46 = scalar_select %p43, %s44, %s45
    %p49 = pneg %p43
    %p50 = scmp.eq.s32.totalorder %s13, 3
    %p51 = por %p49, %p50
    %p52 = scmp.ne.s32.totalorder %s44, %s47
    %p53 = scmp.eq.s32.totalorder %s13, 0
    %p54 = por %p52, %p53
    %p55 = scmp.ne.s32.totalorder %s44, %s47
    %p56 = scmp.eq.s32.totalorder %s18, 3
    %p57 = por %p55, %p56
    %p58 = scmp.ne.s32.totalorder %s47, %s48
    %p59 = scmp.eq.s32.totalorder %s18, 0
    %p60 = por %p58, %p59
    %p61 = scmp.ne.s32.totalorder %s47, %s48
    %p62 = scmp.eq.s32.totalorder %s19, 3
    %p63 = por %p61, %p62
    %p65 = scmp.ne.s32.totalorder %s48, %s64
    %p66 = scmp.eq.s32.totalorder %s19, 0
    %p67 = por %p65, %p66
    %s68 = ssub.s32 %s22, %s31
    %s69 = ssub.s32 %s21, %s35
    %s70 = sor.u32 %s68, %s69
    %p71 = scmp.eq.s32.totalorder %s70, 0
    %s73 = sadd.s32 %s72, 1
    %s74 = scalar_select %p71, %s72, %s73
    %p77 = pneg %p71
    %p78 = scmp.eq.s32.totalorder %s13, 3
    %p79 = por %p77, %p78
    %p80 = scmp.ne.s32.totalorder %s72, %s75
    %p81 = scmp.eq.s32.totalorder %s13, 0
    %p82 = por %p80, %p81
    %p83 = scmp.ne.s32.totalorder %s72, %s75
    %p84 = scmp.eq.s32.totalorder %s18, 3
    %p85 = por %p83, %p84
    %p86 = scmp.ne.s32.totalorder %s75, %s76
    %p87 = scmp.eq.s32.totalorder %s18, 0
    %p88 = por %p86, %p87
    %p89 = scmp.ne.s32.totalorder %s75, %s76
    %p90 = scmp.eq.s32.totalorder %s19, 3
    %p91 = por %p89, %p90
    %p93 = scmp.ne.s32.totalorder %s76, %s92
    %p94 = scmp.eq.s32.totalorder %s19, 0
    %p95 = por %p93, %p94
    %s96 = ssub.s32 %s22, %s31
    %s97 = ssub.s32 %s21, %s35
    %s98 = sor.u32 %s96, %s97
    %p99 = scmp.eq.s32.totalorder %s98, 0
    %s101 = sadd.s32 %s100, 1
    %s102 = scalar_select %p99, %s100, %s101
    %p105 = pneg %p99
    %p106 = scmp.eq.s32.totalorder %s13, 3
    %p107 = por %p105, %p106
    %p108 = scmp.ne.s32.totalorder %s100, %s103
    %p109 = scmp.eq.s32.totalorder %s13, 0
    %p110 = por %p108, %p109
    %p111 = scmp.ne.s32.totalorder %s100, %s103
    %p112 = scmp.eq.s32.totalorder %s18, 3
    %p113 = por %p111, %p112
    %p114 = scmp.ne.s32.totalorder %s103, %s104
    %p115 = scmp.eq.s32.totalorder %s18, 0
    %p116 = por %p114, %p115
    %p117 = scmp.ne.s32.totalorder %s103, %s104
    %p118 = scmp.eq.s32.totalorder %s19, 3
    %p119 = por %p117, %p118
    %p121 = scmp.ne.s32.totalorder %s104, %s120
    %p122 = scmp.eq.s32.totalorder %s19, 0
    %p123 = por %p121, %p122
    %s124 = ssub.s32 %s22, %s31
    %s125 = ssub.s32 %s21, %s35
    %s126 = sor.u32 %s124, %s125
    %p127 = scmp.eq.s32.totalorder %s126, 0
    %s129 = sadd.s32 %s128, 1
    %s130 = scalar_select %p127, %s128, %s129
    %p133 = pneg %p127
    %p134 = scmp.eq.s32.totalorder %s13, 3
    %p135 = por %p133, %p134
    %p136 = scmp.ne.s32.totalorder %s128, %s131
    %p137 = scmp.eq.s32.totalorder %s13, 0
    %p138 = por %p136, %p137
    %p139 = scmp.ne.s32.totalorder %s128, %s131
    %p140 = scmp.eq.s32.totalorder %s18, 3
    %p141 = por %p139, %p140
    %p142 = scmp.ne.s32.totalorder %s131, %s132
    %p143 = scmp.eq.s32.totalorder %s18, 0
    %p144 = por %p142, %p143
    %p145 = scmp.ne.s32.totalorder %s131, %s132
    %p146 = scmp.eq.s32.totalorder %s19, 3
    %p147 = por %p145, %p146
    %p149 = scmp.ne.s32.totalorder %s132, %s148
    %p150 = scmp.eq.s32.totalorder %s19, 0
    %p151 = por %p149, %p150
    %s152 = ssub.s32 %s20, %s39
    %s153 = ssub.s32 %s21, %s35
    %s154 = sor.u32 %s152, %s153
    %p155 = scmp.eq.s32.totalorder %s154, 0
    %s157 = sadd.s32 %s156, 1
    %s158 = scalar_select %p155, %s156, %s157
    %p161 = pneg %p155
    %p162 = scmp.eq.s32.totalorder %s13, 3
    %p163 = por %p161, %p162
    %p164 = scmp.ne.s32.totalorder %s156, %s159
    %p165 = scmp.eq.s32.totalorder %s13, 0
    %p166 = por %p164, %p165
    %p167 = scmp.ne.s32.totalorder %s156, %s159
    %p168 = scmp.eq.s32.totalorder %s18, 3
    %p169 = por %p167, %p168
    %p170 = scmp.ne.s32.totalorder %s159, %s160
    %p171 = scmp.eq.s32.totalorder %s18, 0
    %p172 = por %p170, %p171
    %p173 = scmp.ne.s32.totalorder %s159, %s160
    %p174 = scmp.eq.s32.totalorder %s19, 3
    %p175 = por %p173, %p174
    %p177 = scmp.ne.s32.totalorder %s160, %s176
    %p178 = scmp.eq.s32.totalorder %s19, 0
    %p179 = por %p177, %p178
    %s180 = ssub.s32 %s20, %s39
    %s181 = ssub.s32 %s21, %s35
    %s182 = sor.u32 %s180, %s181
    %p183 = scmp.eq.s32.totalorder %s182, 0
    %s185 = sadd.s32 %s184, 1
    %s186 = scalar_select %p183, %s184, %s185
    %p189 = pneg %p183
    %p190 = scmp.eq.s32.totalorder %s13, 3
    %p191 = por %p189, %p190
    %p192 = scmp.ne.s32.totalorder %s184, %s187
    %p193 = scmp.eq.s32.totalorder %s13, 0
    %p194 = por %p192, %p193
    %p195 = scmp.ne.s32.totalorder %s184, %s187
    %p196 = scmp.eq.s32.totalorder %s18, 3
    %p197 = por %p195, %p196
    %p198 = scmp.ne.s32.totalorder %s187, %s188
    %p199 = scmp.eq.s32.totalorder %s18, 0
    %p200 = por %p198, %p199
    %p201 = scmp.ne.s32.totalorder %s187, %s188
    %p202 = scmp.eq.s32.totalorder %s19, 3
    %p203 = por %p201, %p202
    %p205 = scmp.ne.s32.totalorder %s188, %s204
    %p206 = scmp.eq.s32.totalorder %s19, 0
    %p207 = por %p205, %p206
    %s208 = ssub.s32 %s20, %s39
    %s209 = ssub.s32 %s21, %s35
    %s210 = sor.u32 %s208, %s209
    %p211 = scmp.eq.s32.totalorder %s210, 0
    %s213 = sadd.s32 %s212, 1
    %s214 = scalar_select %p211, %s212, %s213
    %p217 = pneg %p211
    %p218 = scmp.eq.s32.totalorder %s13, 3
    %p219 = por %p217, %p218
    %p220 = scmp.ne.s32.totalorder %s212, %s215
    %p221 = scmp.eq.s32.totalorder %s13, 0
    %p222 = por %p220, %p221
    %p223 = scmp.ne.s32.totalorder %s212, %s215
    %p224 = scmp.eq.s32.totalorder %s18, 3
    %p225 = por %p223, %p224
    %p226 = scmp.ne.s32.totalorder %s215, %s216
    %p227 = scmp.eq.s32.totalorder %s18, 0
    %p228 = por %p226, %p227
    %p229 = scmp.ne.s32.totalorder %s215, %s216
    %p230 = scmp.eq.s32.totalorder %s19, 3
    %p231 = por %p229, %p230
    %p233 = scmp.ne.s32.totalorder %s216, %s232
    %p234 = scmp.eq.s32.totalorder %s19, 0
    %p235 = por %p233, %p234
    %p236 = scmp.le.s32.totalorder 1, %s13
    %p237 = scmp.lt.s32.totalorder %s13, 5
    %p238 = pnand %p236, %p237
    %p239 = pneg %p238
    // Predicated region
    $region9: #{tpu_custom_call.1} parent=5 // pred_check
      _
    $region10: #{tpu_custom_call.1} parent=5 // pred_check_branch
      %241 = sbr.rel (%p238) target = $region12
    $region11: #{tpu_custom_call.1} parent=5 // pred_region
      %s242 = ssub.s32 %s13, 1
      // Predicated region
      $region13: #{tpu_custom_call.1} parent=11 // pred_check
        %p243 = pneg %p88
      $region14: #{tpu_custom_call.1} parent=11 // pred_check_branch
        %245 = sbr.rel (%p243) target = $region16
      $region15: #{tpu_custom_call.1} parent=11 // pred_region
        %s246 = smul.u32 4, %s25
        %p247 = scmp.lt.s32.totalorder %s246, 3
        %s248 = scalar_select %p247, %s246, 3
        %p249 = scmp.lt.s32.totalorder %s24, 0
        %s250 = scalar_select %p249, %s24, 0
        %s251 = sadd.s32 %s250, %s248
        %s252 = smul.addr %s251, 8
        %s253 = scalar_lea.vmem %s1, %s252
        %s254 = smul.u32 4, %s25
      $region16: #{tpu_custom_call.1} parent=11 // pred_fallthru
        _
      // Predicated region
      $region17: #{tpu_custom_call.1} parent=11 // pred_check
        %p255 = pneg %p116
      $region18: #{tpu_custom_call.1} parent=11 // pred_check_branch
        %257 = sbr.rel (%p255) target = $region20
      $region19: #{tpu_custom_call.1} parent=11 // pred_region
        %s258 = smul.u32 4, %s25
        %p259 = scmp.lt.s32.totalorder %s258, 3
        %s260 = scalar_select %p259, %s258, 3
        %p261 = scmp.lt.s32.totalorder %s24, 0
        %s262 = scalar_select %p261, %s24, 0
        %s263 = sadd.s32 %s262, %s260
        %s264 = smul.addr %s263, 8
        %s265 = scalar_lea.vmem %s2, %s264
        %s266 = smul.u32 4, %s25
      $region20: #{tpu_custom_call.1} parent=11 // pred_fallthru
        _
      // Predicated region
      $region21: #{tpu_custom_call.1} parent=11 // pred_check
        %p267 = pneg %p144
      $region22: #{tpu_custom_call.1} parent=11 // pred_check_branch
        %269 = sbr.rel (%p267) target = $region24
      $region23: #{tpu_custom_call.1} parent=11 // pred_region
        %s270 = smul.u32 4, %s25
        %p271 = scmp.lt.s32.totalorder %s270, 3
        %s272 = scalar_select %p271, %s270, 3
        %p273 = scmp.lt.s32.totalorder %s24, 0
        %s274 = scalar_select %p273, %s24, 0
        %s275 = sadd.s32 %s274, %s272
        %s276 = smul.addr %s275, 8
        %s277 = scalar_lea.vmem %s3, %s276
        %s278 = smul.u32 4, %s25
      $region24: #{tpu_custom_call.1} parent=11 // pred_fallthru
        _
    $region12: #{tpu_custom_call.1} parent=5 // pred_fallthru
      _
    %p279 = scmp.lt.s32.totalorder %s13, 4
    // Predicated region
    $region25: #{tpu_custom_call.1} parent=5 // pred_check
      %p280 = pneg %p279
    $region26: #{tpu_custom_call.1} parent=5 // pred_check_branch
      %282 = sbr.rel (%p280) target = $region28
    $region27: #{tpu_custom_call.1} parent=5 // pred_region
      // Predicated region
      $region29: #{tpu_custom_call.1} parent=27 // pred_check
        %p283 = pneg %p54
      $region30: #{tpu_custom_call.1} parent=27 // pred_check_branch
        %285 = sbr.rel (%p283) target = $region32
      $region31: #{tpu_custom_call.1} parent=27 // pred_region
        %s286 = smul.u32 2, %s20
        %p287 = scmp.lt.s32.totalorder %s286, 7
        %s288 = scalar_select %p287, %s286, 7
        %p289 = scmp.lt.s32.totalorder %s22, 0
        %s290 = scalar_select %p289, %s22, 0
        %s291 = sadd.s32 %s290, %s288
        %s292 = smul.addr %s291, 8
        %s293 = scalar_lea.vmem %s0, %s292
        %s294 = smul.u32 2, %s20
      $region32: #{tpu_custom_call.1} parent=27 // pred_fallthru
        _
    $region28: #{tpu_custom_call.1} parent=5 // pred_fallthru
      _
    %p295 = scmp.le.s32.totalorder 1, %s13
    %p296 = scmp.lt.s32.totalorder %s13, 5
    %p297 = pnand %p295, %p296
    %p298 = pneg %p297
    // Predicated region
    $region33: #{tpu_custom_call.1} parent=5 // pred_check
      _
    $region34: #{tpu_custom_call.1} parent=5 // pred_check_branch
      %300 = sbr.rel (%p297) target = $region36
    $region35: #{tpu_custom_call.1} parent=5 // pred_region
      %s301 = ssub.s32 %s13, 1
      %s302 = smul.u32 2, %s23
      %p303 = scmp.lt.s32.totalorder %s302, 7
      %s304 = scalar_select %p303, %s302, 7
      %p305 = scmp.lt.s32.totalorder %s25, 0
      %s306 = scalar_select %p305, %s25, 0
      %s307 = sadd.s32 %s306, %s304
      %s308 = smul.addr %s307, 8
      %s309 = scalar_lea.vmem %s0, %s308
      %p310 = pneg %p60
      %p311 = pneg %p57
      %s312 = smul.u32 4, %s25
      %p313 = scmp.lt.s32.totalorder %s312, 3
      %s314 = scalar_select %p313, %s312, 3
      %p315 = scmp.lt.s32.totalorder %s24, 0
      %s316 = scalar_select %p315, %s24, 0
      %s317 = sadd.s32 %s316, %s314
      %s318 = smul.addr %s317, 8
      %s319 = scalar_lea.vmem %s1, %s318
      %p320 = pneg %p88
      %p321 = pneg %p85
      %s322 = smul.u32 4, %s25
      %p323 = scmp.lt.s32.totalorder %s322, 3
      %s324 = scalar_select %p323, %s322, 3
      %p325 = scmp.lt.s32.totalorder %s24, 0
      %s326 = scalar_select %p325, %s24, 0
      %s327 = sadd.s32 %s326, %s324
      %s328 = smul.addr %s327, 8
      %s329 = scalar_lea.vmem %s2, %s328
      %p330 = pneg %p116
      %p331 = pneg %p113
      %s332 = smul.u32 4, %s25
      %p333 = scmp.lt.s32.totalorder %s332, 3
      %s334 = scalar_select %p333, %s332, 3
      %p335 = scmp.lt.s32.totalorder %s24, 0
      %s336 = scalar_select %p335, %s24, 0
      %s337 = sadd.s32 %s336, %s334
      %s338 = smul.addr %s337, 8
      %s339 = scalar_lea.vmem %s3, %s338
      %p340 = pneg %p144
      %p341 = pneg %p141
      %p342 = pneg %p172
      %p343 = pneg %p169
      %s344 = smul.u32 2, %s23
      %p345 = scmp.lt.s32.totalorder %s344, 7
      %s346 = scalar_select %p345, %s344, 7
      %p347 = scmp.lt.s32.totalorder %s24, 0
      %s348 = scalar_select %p347, %s24, 0
      %s349 = sadd.s32 %s348, %s346
      %s350 = smul.addr %s349, 8
      %s351 = scalar_lea.vmem %s4, %s350
      %p352 = pneg %p200
      %p353 = pneg %p197
      %s354 = smul.u32 2, %s23
      %p355 = scmp.lt.s32.totalorder %s354, 7
      %s356 = scalar_select %p355, %s354, 7
      %p357 = scmp.lt.s32.totalorder %s24, 0
      %s358 = scalar_select %p357, %s24, 0
      %s359 = sadd.s32 %s358, %s356
      %s360 = smul.addr %s359, 8
      %s361 = scalar_lea.vmem %s5, %s360
      %p362 = pneg %p228
      %p363 = pneg %p225
      %s364 = smul.u32 2, %s23
      %p365 = scmp.lt.s32.totalorder %s364, 7
      %s366 = scalar_select %p365, %s364, 7
      %p367 = scmp.lt.s32.totalorder %s24, 0
      %s368 = scalar_select %p367, %s24, 0
      %s369 = sadd.s32 %s368, %s366
      %s370 = smul.addr %s369, 8
      %s371 = scalar_lea.vmem %s6, %s370
      %s372 = smul.u32 2, %s23
      %p373 = scmp.lt.s32.totalorder %s372, 7
      %s374 = scalar_select %p373, %s372, 7
      %p375 = scmp.lt.s32.totalorder %s25, 0
      %s376 = scalar_select %p375, %s25, 0
      %s377 = sadd.s32 %s376, %s374
      %s378 = smul.addr %s377, 8
      %s379 = scalar_lea.vmem %s0, %s378
      %s380 = smul.u32 2, %s23
      %s381 = smul.u32 4, %s25
      %p382 = scmp.lt.s32.totalorder %s381, 3
      %s383 = scalar_select %p382, %s381, 3
      %p384 = scmp.lt.s32.totalorder %s24, 0
      %s385 = scalar_select %p384, %s24, 0
      %s386 = sadd.s32 %s385, %s383
      %s387 = smul.addr %s386, 8
      %s388 = scalar_lea.vmem %s1, %s387
      %s389 = smul.u32 4, %s25
      %s390 = smul.u32 4, %s25
      %p391 = scmp.lt.s32.totalorder %s390, 3
      %s392 = scalar_select %p391, %s390, 3
      %p393 = scmp.lt.s32.totalorder %s24, 0
      %s394 = scalar_select %p393, %s24, 0
      %s395 = sadd.s32 %s394, %s392
      %s396 = smul.addr %s395, 8
      %s397 = scalar_lea.vmem %s2, %s396
      %s398 = smul.u32 4, %s25
      %s399 = smul.u32 4, %s25
      %p400 = scmp.lt.s32.totalorder %s399, 3
      %s401 = scalar_select %p400, %s399, 3
      %p402 = scmp.lt.s32.totalorder %s24, 0
      %s403 = scalar_select %p402, %s24, 0
      %s404 = sadd.s32 %s403, %s401
      %s405 = smul.addr %s404, 8
      %s406 = scalar_lea.vmem %s3, %s405
      %s407 = smul.u32 4, %s25
      %s408 = smul.u32 2, %s23
      %p409 = scmp.lt.s32.totalorder %s408, 7
      %s410 = scalar_select %p409, %s408, 7
      %p411 = scmp.lt.s32.totalorder %s24, 0
      %s412 = scalar_select %p411, %s24, 0
      %s413 = sadd.s32 %s412, %s410
      %s414 = smul.addr %s413, 8
      %s415 = scalar_lea.vmem %s4, %s414
      %s416 = smul.u32 2, %s23
      %s417 = smul.u32 2, %s23
      %p418 = scmp.lt.s32.totalorder %s417, 7
      %s419 = scalar_select %p418, %s417, 7
      %p420 = scmp.lt.s32.totalorder %s24, 0
      %s421 = scalar_select %p420, %s24, 0
      %s422 = sadd.s32 %s421, %s419
      %s423 = smul.addr %s422, 8
      %s424 = scalar_lea.vmem %s5, %s423
      %s425 = smul.u32 2, %s23
      %s426 = smul.u32 2, %s23
      %p427 = scmp.lt.s32.totalorder %s426, 7
      %s428 = scalar_select %p427, %s426, 7
      %p429 = scmp.lt.s32.totalorder %s24, 0
      %s430 = scalar_select %p429, %s24, 0
      %s431 = sadd.s32 %s430, %s428
      %s432 = smul.addr %s431, 8
      %s433 = scalar_lea.vmem %s6, %s432
      %s434 = smul.u32 2, %s23
      %p435 = scmp.eq.s32.totalorder %s25, 0
      // Predicated region
      $region37: #{tpu_custom_call.1} parent=35 // pred_check
        %p436 = pneg %p435
      $region38: #{tpu_custom_call.1} parent=35 // pred_check_branch
        %438 = sbr.rel (%p436) target = $region40
      $region39: #{tpu_custom_call.1} parent=35 // pred_region
        %vm439 = vcmask 261120
        %440 = vst.msk [vmem:[#allocation2] sm:$0xff] %vm439, 0.0
        %441 = vst.msk [vmem:[#allocation2 + $0x8] sm:$0xff] %vm439, 0.0
        %442 = vst.msk [vmem:[#allocation3] sm:$0xff] %vm439, 0.0
        %443 = vst.msk [vmem:[#allocation3 + $0x8] sm:$0xff] %vm439, 0.0
        %444 = vst.msk [vmem:[#allocation4] sm:$0xff] %vm439, 0.0
        %445 = vst.msk [vmem:[#allocation4 + $0x8] sm:$0xff] %vm439, 0.0
      $region40: #{tpu_custom_call.1} parent=35 // pred_fallthru
        _
      %v446 = vld [vmem:[%s379] sm:$0xff]
      %v447 = vld [vmem:[%s379 + $0x8] sm:$0xff]
      %v448 = vld [vmem:[#allocation2] sm:$0xff]
      %v449 = vld [vmem:[#allocation2 + $0x8] sm:$0xff]
      %v450 = vld [vmem:[%s388] sm:$0xff]
      %v451 = vld [vmem:[%s388 + $0x8] sm:$0xff]
      %v452 = vld [vmem:[%s388 + $0x10] sm:$0xff]
      %v453 = vld [vmem:[%s388 + $0x18] sm:$0xff]
      %vm454 = vcmask 261120
      %v456 = vsel %vm454, %v446, 0
      %v459 = vsel %vm454, %v447, 0
      %461 = vmatprep.subr.mxu0 0.0
      %462 = vmatpush1.msra.mxu0 0.0
      %463 = vmatprep.subr.mxu0 0.0
      %464 = vmatpush1.msra.mxu0 0.0
      %465 = vmatprep.subr.mxu0 0.0
      %466 = vmatpush1.msra.mxu0 0.0
      %467 = vmatprep.subr.mxu0 0.0
      %468 = vmatpush1.msra.mxu0 0.0
      %469 = vmatprep.subr.mxu0 0.0
      %470 = vmatpush1.msra.mxu0 0.0
      %471 = vmatprep.subr.mxu0 0.0
      %472 = vmatpush1.msra.mxu0 0.0
      %473 = vmatprep.subr.mxu0 0.0
      %474 = vmatpush1.msra.mxu0 0.0
      %475 = vmatprep.subr.mxu0 0.0
      %476 = vmatpush1.msra.mxu0 0.0
      %477 = vmatprep.subr.mxu0 0.0
      %478 = vmatpush1.msra.mxu0 0.0
      %479 = vmatprep.subr.mxu0 0.0
      %480 = vmatpush1.msra.mxu0 0.0
      %481 = vmatprep.subr.mxu0 0.0
      %482 = vmatpush1.msra.mxu0 0.0
      %483 = vmatprep.subr.mxu0 0.0
      %484 = vmatpush1.msra.mxu0 0.0
      %485 = vmatprep.subr.mxu0 0.0
      %486 = vmatpush1.msra.mxu0 %v453
      %487 = vmatprep.subr.mxu0 0.0
      %488 = vmatpush1.msra.mxu0 %v452
      %489 = vmatprep.subr.mxu0 0.0
      %490 = vmatpush1.msra.mxu0 %v451
      %491 = vmatprep.subr.mxu0 0.0
      %492 = vmatpush1.msra.mxu0 %v450
      %493 = vmatprep.subr.mxu0 0.0
      %494 = vmatpush2.msra.mxu0 0.0
      %495 = vmatprep.subr.mxu0 0.0
      %496 = vmatpush2.msra.mxu0 0.0
      %497 = vmatprep.subr.mxu0 0.0
      %498 = vmatpush2.msra.mxu0 0.0
      %499 = vmatprep.subr.mxu0 0.0
      %500 = vmatpush2.msra.mxu0 0.0
      %501 = vmatprep.subr.mxu0 0.0
      %502 = vmatpush2.msra.mxu0 0.0
      %503 = vmatprep.subr.mxu0 0.0
      %504 = vmatpush2.msra.mxu0 0.0
      %505 = vmatprep.subr.mxu0 0.0
      %506 = vmatpush2.msra.mxu0 0.0
      %507 = vmatprep.subr.mxu0 0.0
      %508 = vmatpush2.msra.mxu0 0.0
      %509 = vmatprep.subr.mxu0 0.0
      %510 = vmatpush2.msra.mxu0 0.0
      %511 = vmatprep.subr.mxu0 0.0
      %512 = vmatpush2.msra.mxu0 0.0
      %513 = vmatprep.subr.mxu0 0.0
      %514 = vmatpush2.msra.mxu0 0.0
      %515 = vmatprep.subr.mxu0 0.0
      %516 = vmatpush2.msra.mxu0 0.0
      %517 = vmatprep.subr.mxu0 0.0
      %518 = vmatpush2.msra.mxu0 0.0
      %519 = vmatprep.subr.mxu0 0.0
      %520 = vmatpush2.msra.mxu0 0.0
      %521 = vmatprep.subr.mxu0 0.0
      %522 = vmatpush2.msra.mxu0 0.0
      %523 = vmatprep.subr.mxu0 0.0
      %524 = vmatpush2.msra.mxu0 0.0
      %525 = vmatprep.mubr.f32.mxu0 0.0
      %526 = vmatmul.mubr.f32.gmra.mxu0 %v456
      %v527 = vpop.f32.mrf.mxu0
      %v528 = vadd.f32 0.0, %v527
      %v529 = vpop.f32.mrf.mxu0
      %530 = vmatprep.mubr.f32.mxu0 0.0
      %531 = vmatmul.mubr.f32.gmra.mxu0 %v459
      %v532 = vpop.f32.mrf.mxu0
      %v533 = vadd.f32 0.0, %v532
      %v534 = vpop.f32.mrf.mxu0
      %535 = vdwg.mxu0
      %v536 = vadd.f32 %v448, %v528
      %v537 = vadd.f32 %v449, %v533
      %538 = vst.msk [vmem:[#allocation2] sm:$0xff] %vm454, %v536
      %539 = vst.msk [vmem:[#allocation2 + $0x8] sm:$0xff] %vm454, %v537
      %v540 = vld [vmem:[#allocation3] sm:$0xff]
      %v541 = vld [vmem:[#allocation3 + $0x8] sm:$0xff]
      %v542 = vld [vmem:[%s397] sm:$0xff]
      %v543 = vld [vmem:[%s397 + $0x8] sm:$0xff]
      %v544 = vld [vmem:[%s397 + $0x10] sm:$0xff]
      %v545 = vld [vmem:[%s397 + $0x18] sm:$0xff]
      %546 = vmatprep.subr.mxu0 0.0
      %547 = vmatpush1.msra.mxu0 0.0
      %548 = vmatprep.subr.mxu0 0.0
      %549 = vmatpush1.msra.mxu0 0.0
      %550 = vmatprep.subr.mxu0 0.0
      %551 = vmatpush1.msra.mxu0 0.0
      %552 = vmatprep.subr.mxu0 0.0
      %553 = vmatpush1.msra.mxu0 0.0
      %554 = vmatprep.subr.mxu0 0.0
      %555 = vmatpush1.msra.mxu0 0.0
      %556 = vmatprep.subr.mxu0 0.0
      %557 = vmatpush1.msra.mxu0 0.0
      %558 = vmatprep.subr.mxu0 0.0
      %559 = vmatpush1.msra.mxu0 0.0
      %560 = vmatprep.subr.mxu0 0.0
      %561 = vmatpush1.msra.mxu0 0.0
      %562 = vmatprep.subr.mxu0 0.0
      %563 = vmatpush1.msra.mxu0 0.0
      %564 = vmatprep.subr.mxu0 0.0
      %565 = vmatpush1.msra.mxu0 0.0
      %566 = vmatprep.subr.mxu0 0.0
      %567 = vmatpush1.msra.mxu0 0.0
      %568 = vmatprep.subr.mxu0 0.0
      %569 = vmatpush1.msra.mxu0 0.0
      %570 = vmatprep.subr.mxu0 0.0
      %571 = vmatpush1.msra.mxu0 %v545
      %572 = vmatprep.subr.mxu0 0.0
      %573 = vmatpush1.msra.mxu0 %v544
      %574 = vmatprep.subr.mxu0 0.0
      %575 = vmatpush1.msra.mxu0 %v543
      %576 = vmatprep.subr.mxu0 0.0
      %577 = vmatpush1.msra.mxu0 %v542
      %578 = vmatprep.subr.mxu0 0.0
      %579 = vmatpush2.msra.mxu0 0.0
      %580 = vmatprep.subr.mxu0 0.0
      %581 = vmatpush2.msra.mxu0 0.0
      %582 = vmatprep.subr.mxu0 0.0
      %583 = vmatpush2.msra.mxu0 0.0
      %584 = vmatprep.subr.mxu0 0.0
      %585 = vmatpush2.msra.mxu0 0.0
      %586 = vmatprep.subr.mxu0 0.0
      %587 = vmatpush2.msra.mxu0 0.0
      %588 = vmatprep.subr.mxu0 0.0
      %589 = vmatpush2.msra.mxu0 0.0
      %590 = vmatprep.subr.mxu0 0.0
      %591 = vmatpush2.msra.mxu0 0.0
      %592 = vmatprep.subr.mxu0 0.0
      %593 = vmatpush2.msra.mxu0 0.0
      %594 = vmatprep.subr.mxu0 0.0
      %595 = vmatpush2.msra.mxu0 0.0
      %596 = vmatprep.subr.mxu0 0.0
      %597 = vmatpush2.msra.mxu0 0.0
      %598 = vmatprep.subr.mxu0 0.0
      %599 = vmatpush2.msra.mxu0 0.0
      %600 = vmatprep.subr.mxu0 0.0
      %601 = vmatpush2.msra.mxu0 0.0
      %602 = vmatprep.subr.mxu0 0.0
      %603 = vmatpush2.msra.mxu0 0.0
      %604 = vmatprep.subr.mxu0 0.0
      %605 = vmatpush2.msra.mxu0 0.0
      %606 = vmatprep.subr.mxu0 0.0
      %607 = vmatpush2.msra.mxu0 0.0
      %608 = vmatprep.subr.mxu0 0.0
      %609 = vmatpush2.msra.mxu0 0.0
      %610 = vmatprep.mubr.f32.mxu0 0.0
      %611 = vmatmul.mubr.f32.gmra.mxu0 %v456
      %v612 = vpop.f32.mrf.mxu0
      %v613 = vadd.f32 0.0, %v612
      %v614 = vpop.f32.mrf.mxu0
      %615 = vmatprep.mubr.f32.mxu0 0.0
      %616 = vmatmul.mubr.f32.gmra.mxu0 %v459
      %v617 = vpop.f32.mrf.mxu0
      %v618 = vadd.f32 0.0, %v617
      %v619 = vpop.f32.mrf.mxu0
      %620 = vdwg.mxu0
      %v621 = vadd.f32 %v540, %v613
      %v622 = vadd.f32 %v541, %v618
      %623 = vst.msk [vmem:[#allocation3] sm:$0xff] %vm454, %v621
      %624 = vst.msk [vmem:[#allocation3 + $0x8] sm:$0xff] %vm454, %v622
      %v625 = vld [vmem:[#allocation4] sm:$0xff]
      %v626 = vld [vmem:[#allocation4 + $0x8] sm:$0xff]
      %v627 = vld [vmem:[%s406] sm:$0xff]
      %v628 = vld [vmem:[%s406 + $0x8] sm:$0xff]
      %v629 = vld [vmem:[%s406 + $0x10] sm:$0xff]
      %v630 = vld [vmem:[%s406 + $0x18] sm:$0xff]
      %631 = vmatprep.subr.mxu0 0.0
      %632 = vmatpush1.msra.mxu0 0.0
      %633 = vmatprep.subr.mxu0 0.0
      %634 = vmatpush1.msra.mxu0 0.0
      %635 = vmatprep.subr.mxu0 0.0
      %636 = vmatpush1.msra.mxu0 0.0
      %637 = vmatprep.subr.mxu0 0.0
      %638 = vmatpush1.msra.mxu0 0.0
      %639 = vmatprep.subr.mxu0 0.0
      %640 = vmatpush1.msra.mxu0 0.0
      %641 = vmatprep.subr.mxu0 0.0
      %642 = vmatpush1.msra.mxu0 0.0
      %643 = vmatprep.subr.mxu0 0.0
      %644 = vmatpush1.msra.mxu0 0.0
      %645 = vmatprep.subr.mxu0 0.0
      %646 = vmatpush1.msra.mxu0 0.0
      %647 = vmatprep.subr.mxu0 0.0
      %648 = vmatpush1.msra.mxu0 0.0
      %649 = vmatprep.subr.mxu0 0.0
      %650 = vmatpush1.msra.mxu0 0.0
      %651 = vmatprep.subr.mxu0 0.0
      %652 = vmatpush1.msra.mxu0 0.0
      %653 = vmatprep.subr.mxu0 0.0
      %654 = vmatpush1.msra.mxu0 0.0
      %655 = vmatprep.subr.mxu0 0.0
      %656 = vmatpush1.msra.mxu0 %v630
      %657 = vmatprep.subr.mxu0 0.0
      %658 = vmatpush1.msra.mxu0 %v629
      %659 = vmatprep.subr.mxu0 0.0
      %660 = vmatpush1.msra.mxu0 %v628
      %661 = vmatprep.subr.mxu0 0.0
      %662 = vmatpush1.msra.mxu0 %v627
      %663 = vmatprep.subr.mxu0 0.0
      %664 = vmatpush2.msra.mxu0 0.0
      %665 = vmatprep.subr.mxu0 0.0
      %666 = vmatpush2.msra.mxu0 0.0
      %667 = vmatprep.subr.mxu0 0.0
      %668 = vmatpush2.msra.mxu0 0.0
      %669 = vmatprep.subr.mxu0 0.0
      %670 = vmatpush2.msra.mxu0 0.0
      %671 = vmatprep.subr.mxu0 0.0
      %672 = vmatpush2.msra.mxu0 0.0
      %673 = vmatprep.subr.mxu0 0.0
      %674 = vmatpush2.msra.mxu0 0.0
      %675 = vmatprep.subr.mxu0 0.0
      %676 = vmatpush2.msra.mxu0 0.0
      %677 = vmatprep.subr.mxu0 0.0
      %678 = vmatpush2.msra.mxu0 0.0
      %679 = vmatprep.subr.mxu0 0.0
      %680 = vmatpush2.msra.mxu0 0.0
      %681 = vmatprep.subr.mxu0 0.0
      %682 = vmatpush2.msra.mxu0 0.0
      %683 = vmatprep.subr.mxu0 0.0
      %684 = vmatpush2.msra.mxu0 0.0
      %685 = vmatprep.subr.mxu0 0.0
      %686 = vmatpush2.msra.mxu0 0.0
      %687 = vmatprep.subr.mxu0 0.0
      %688 = vmatpush2.msra.mxu0 0.0
      %689 = vmatprep.subr.mxu0 0.0
      %690 = vmatpush2.msra.mxu0 0.0
      %691 = vmatprep.subr.mxu0 0.0
      %692 = vmatpush2.msra.mxu0 0.0
      %693 = vmatprep.subr.mxu0 0.0
      %694 = vmatpush2.msra.mxu0 0.0
      %695 = vmatprep.mubr.f32.mxu0 0.0
      %696 = vmatmul.mubr.f32.gmra.mxu0 %v456
      %v697 = vpop.f32.mrf.mxu0
      %v698 = vadd.f32 0.0, %v697
      %v699 = vpop.f32.mrf.mxu0
      %700 = vmatprep.mubr.f32.mxu0 0.0
      %701 = vmatmul.mubr.f32.gmra.mxu0 %v459
      %v702 = vpop.f32.mrf.mxu0
      %v703 = vadd.f32 0.0, %v702
      %v704 = vpop.f32.mrf.mxu0
      %705 = vdwg.mxu0
      %v706 = vadd.f32 %v625, %v698
      %v707 = vadd.f32 %v626, %v703
      %708 = vst.msk [vmem:[#allocation4] sm:$0xff] %vm454, %v706
      %709 = vst.msk [vmem:[#allocation4 + $0x8] sm:$0xff] %vm454, %v707
      // Predicated region
      $region41: #{tpu_custom_call.1} parent=35 // pred_check
        %p710 = pneg %p435
      $region42: #{tpu_custom_call.1} parent=35 // pred_check_branch
        %712 = sbr.rel (%p710) target = $region44
      $region43: #{tpu_custom_call.1} parent=35 // pred_region
        %v713 = vld [vmem:[#allocation2] sm:$0xff]
        %v714 = vld [vmem:[#allocation2 + $0x8] sm:$0xff]
        %715 = vst.msk [vmem:[%s415] sm:$0xff] %vm454, %v713
        %716 = vst.msk [vmem:[%s415 + $0x8] sm:$0xff] %vm454, %v714
        %v717 = vld [vmem:[#allocation3] sm:$0xff]
        %v718 = vld [vmem:[#allocation3 + $0x8] sm:$0xff]
        %719 = vst.msk [vmem:[%s424] sm:$0xff] %vm454, %v717
        %720 = vst.msk [vmem:[%s424 + $0x8] sm:$0xff] %vm454, %v718
        %v721 = vld [vmem:[#allocation4] sm:$0xff]
        %v722 = vld [vmem:[#allocation4 + $0x8] sm:$0xff]
        %723 = vst.msk [vmem:[%s433] sm:$0xff] %vm454, %v721
        %724 = vst.msk [vmem:[%s433 + $0x8] sm:$0xff] %vm454, %v722
      $region44: #{tpu_custom_call.1} parent=35 // pred_fallthru
        _
      %s725 = smul.u32 2, %s23
      %p726 = scmp.lt.s32.totalorder %s725, 7
      %s727 = scalar_select %p726, %s725, 7
      %p728 = scmp.lt.s32.totalorder %s24, 0
      %s729 = scalar_select %p728, %s24, 0
      %s730 = sadd.s32 %s729, %s727
      %s731 = smul.addr %s730, 8
      %s732 = scalar_lea.vmem %s4, %s731
      %s733 = smul.u32 2, %s23
      %p734 = scmp.lt.s32.totalorder %s733, 7
      %s735 = scalar_select %p734, %s733, 7
      %p736 = scmp.lt.s32.totalorder %s24, 0
      %s737 = scalar_select %p736, %s24, 0
      %s738 = sadd.s32 %s737, %s735
      %s739 = smul.addr %s738, 8
      %s740 = scalar_lea.vmem %s5, %s739
      %s741 = smul.u32 2, %s23
      %p742 = scmp.lt.s32.totalorder %s741, 7
      %s743 = scalar_select %p742, %s741, 7
      %p744 = scmp.lt.s32.totalorder %s24, 0
      %s745 = scalar_select %p744, %s24, 0
      %s746 = sadd.s32 %s745, %s743
      %s747 = smul.addr %s746, 8
      %s748 = scalar_lea.vmem %s6, %s747
      // Predicated region
      $region45: #{tpu_custom_call.1} parent=35 // pred_check
        %p749 = pneg %p169
      $region46: #{tpu_custom_call.1} parent=35 // pred_check_branch
        %751 = sbr.rel (%p749) target = $region48
      $region47: #{tpu_custom_call.1} parent=35 // pred_region
        %s752 = smul.u32 2, %s23
      $region48: #{tpu_custom_call.1} parent=35 // pred_fallthru
        _
      // Predicated region
      $region49: #{tpu_custom_call.1} parent=35 // pred_check
        %p753 = pneg %p197
      $region50: #{tpu_custom_call.1} parent=35 // pred_check_branch
        %755 = sbr.rel (%p753) target = $region52
      $region51: #{tpu_custom_call.1} parent=35 // pred_region
        %s756 = smul.u32 2, %s23
      $region52: #{tpu_custom_call.1} parent=35 // pred_fallthru
        _
      // Predicated region
      $region53: #{tpu_custom_call.1} parent=35 // pred_check
        %p757 = pneg %p225
      $region54: #{tpu_custom_call.1} parent=35 // pred_check_branch
        %759 = sbr.rel (%p757) target = $region56
      $region55: #{tpu_custom_call.1} parent=35 // pred_region
        %s760 = smul.u32 2, %s23
      $region56: #{tpu_custom_call.1} parent=35 // pred_fallthru
        _
    $region36: #{tpu_custom_call.1} parent=5 // pred_fallthru
      _
    %p761 = scmp.le.s32.totalorder 2, %s13
    // Predicated region
    $region57: #{tpu_custom_call.1} parent=5 // pred_check
      %p762 = pneg %p761
    $region58: #{tpu_custom_call.1} parent=5 // pred_check_branch
      %764 = sbr.rel (%p762) target = $region60
    $region59: #{tpu_custom_call.1} parent=5 // pred_region
      %s765 = ssub.s32 %s13, 2
      // Predicated region
      $region61: #{tpu_custom_call.1} parent=59 // pred_check
        %p766 = pneg %p175
      $region62: #{tpu_custom_call.1} parent=59 // pred_check_branch
        %768 = sbr.rel (%p766) target = $region64
      $region63: #{tpu_custom_call.1} parent=59 // pred_region
        %s769 = smul.u32 2, %s26
        %p770 = scmp.lt.s32.totalorder %s769, 7
        %s771 = scalar_select %p770, %s769, 7
        %p772 = scmp.lt.s32.totalorder %s27, 0
        %s773 = scalar_select %p772, %s27, 0
        %s774 = sadd.s32 %s773, %s771
        %s775 = smul.addr %s774, 8
        %s776 = scalar_lea.vmem %s4, %s775
      $region64: #{tpu_custom_call.1} parent=59 // pred_fallthru
        _
      // Predicated region
      $region65: #{tpu_custom_call.1} parent=59 // pred_check
        %p777 = pneg %p203
      $region66: #{tpu_custom_call.1} parent=59 // pred_check_branch
        %779 = sbr.rel (%p777) target = $region68
      $region67: #{tpu_custom_call.1} parent=59 // pred_region
        %s780 = smul.u32 2, %s26
        %p781 = scmp.lt.s32.totalorder %s780, 7
        %s782 = scalar_select %p781, %s780, 7
        %p783 = scmp.lt.s32.totalorder %s27, 0
        %s784 = scalar_select %p783, %s27, 0
        %s785 = sadd.s32 %s784, %s782
        %s786 = smul.addr %s785, 8
        %s787 = scalar_lea.vmem %s5, %s786
      $region68: #{tpu_custom_call.1} parent=59 // pred_fallthru
        _
      // Predicated region
      $region69: #{tpu_custom_call.1} parent=59 // pred_check
        %p788 = pneg %p231
      $region70: #{tpu_custom_call.1} parent=59 // pred_check_branch
        %790 = sbr.rel (%p788) target = $region72
      $region71: #{tpu_custom_call.1} parent=59 // pred_region
        %s791 = smul.u32 2, %s26
        %p792 = scmp.lt.s32.totalorder %s791, 7
        %s793 = scalar_select %p792, %s791, 7
        %p794 = scmp.lt.s32.totalorder %s27, 0
        %s795 = scalar_select %p794, %s27, 0
        %s796 = sadd.s32 %s795, %s793
        %s797 = smul.addr %s796, 8
        %s798 = scalar_lea.vmem %s6, %s797
      $region72: #{tpu_custom_call.1} parent=59 // pred_fallthru
        _
    $region60: #{tpu_custom_call.1} parent=5 // pred_fallthru
      _
  $region6: #{tpu_custom_call.1} parent=0 // loop_footer
    %s17 = sadd.s32 1, %s13
  $region7: #{tpu_custom_call.1} parent=0 // loop_footer_branch
    %12 = sbr.rel target = $region3
  $region8: #{tpu_custom_call.1} parent=0 // loop_exit
    _

</llo_original>
